<compile_context>
chip_gen: v7x
topology: tpu7x:2x2x1
jax: 0.10.0
libtpu: 0.0.40
codegen_flags: <defaults>
</compile_context>

<pallas_src>
import functools

import jax
import jax.numpy as jnp
from jax import lax
from jax.experimental import pallas as pl
from jax.experimental.pallas import tpu as pltpu


def _round_up(x, m):
    return ((x + m - 1) // m) * m


def _vmem_capacity_bytes():
    """Physical VMEM of the local TPU; conservative (v7x) default on failure."""
    try:
        cap = getattr(pltpu.get_tpu_info(), "vmem_capacity_bytes", None)
        if cap:
            return int(cap)
    except Exception:
        pass
    return 64 * 1024 * 1024


def _encoder_kernel(x_ref, w_ref, o_ref):
    # x_ref: [TB, size]  batch tile (fast grid axis; resident when B fits one tile)
    # w_ref: [TN, size]  native-layout weight tile (slow grid axis -> streamed once)
    # o_ref: [TB, TN]    lane-dense output tile (TN multiple of 128 or full hd_dim)
    h = lax.dot_general(
        x_ref[...], w_ref[...],
        dimension_numbers=(((1,), (1,)), ((), ())),   # x @ w.T on the MXU
        preferred_element_type=jnp.float32,
    )
    one = jnp.asarray(1.0, dtype=o_ref.dtype)
    # hard_quantize: strictly positive -> +1, else -> -1
    o_ref[...] = jnp.where(h > 0.0, one, -one)


def _pick_tiles(B, hd_dim, size, x_bytes, w_bytes, o_bytes, budget):
    """Largest lane-dense tiles whose double-buffered, layout-padded footprint
    fits `budget`.  tile_n is a multiple of 128 (or the full hd_dim); tile_b is
    the full batch (if small) or a multiple of 8; ragged last blocks are fine
    because pl.cdiv grids + masked stores handle them."""
    size_pad = _round_up(size, 128)            # lane padding of the contraction dim

    def fits(tb, tn):
        tb_pad = _round_up(tb, 8)
        tn_sub = _round_up(tn, 8)
        tn_lane = _round_up(tn, 128)
        need = 2 * (tb_pad * size_pad * x_bytes       # x tile   (double-buffered)
                    + tn_sub * size_pad * w_bytes     # w tile
                    + tb_pad * tn_lane * o_bytes)     # out tile
        return need <= budget

    # hd_dim tile candidates (descending): the full dim (always legal), then
    # every multiple of 128 below it.
    n_cands = []
    if hd_dim % 128 != 0:
        n_cands.append(hd_dim)
    n_cands += list(range((hd_dim // 128) * 128, 0, -128))
    if not n_cands:
        n_cands = [hd_dim]

    # batch tile candidates: full batch if small, else 8-aligned ragged tiles.
    b_cands = [B] if B <= 256 else [256, 128, 64, 32, 16, 8]

    for tb in b_cands:
        for tn in n_cands:
            if fits(tb, tn):
                return tb, tn
    # Best-effort fallback: smallest lane-dense tiles.
    return b_cands[-1], n_cands[-1]


@functools.partial(jax.jit, static_argnames=("out_dtype",))
def encoder_forward(x, weight, out_dtype=jnp.float32):
    """x: [B, size]; weight: [hd_dim, size] (PyTorch Projection layout).

    Pass a bfloat16 `weight` to halve HBM read traffic (f32 accumulation is
    kept), and/or out_dtype=jnp.bfloat16 to halve the store traffic (+-1 is
    exact in bf16)."""
    B, size = x.shape
    hd_dim, wsize = weight.shape
    assert wsize == size

    vmem_cap = _vmem_capacity_bytes()
    tile_budget = int(vmem_cap * 0.60)                      # ~38 MiB on v7x, ~77 MiB on v5e/v6e
    vmem_limit = min(int(vmem_cap * 0.75), 100 * 1024 * 1024)

    x_bytes = jnp.dtype(x.dtype).itemsize
    w_bytes = jnp.dtype(weight.dtype).itemsize
    o_bytes = jnp.dtype(out_dtype).itemsize

    tile_b, tile_n = _pick_tiles(B, hd_dim, size, x_bytes, w_bytes, o_bytes, tile_budget)
    grid_n = pl.cdiv(hd_dim, tile_n)
    grid_b = pl.cdiv(B, tile_b)

    # Guarantee >=2 parallel grid steps so both v7x TensorCores get work; the
    # extra step is ~free on single-TC v5e/v6e (mem-bound kernel).
    if grid_n * grid_b == 1 and hd_dim > 128:
        tile_n = _round_up(pl.cdiv(hd_dim, 2), 128)
        grid_n = pl.cdiv(hd_dim, tile_n)

    cost = pl.CostEstimate(
        flops=2 * B * size * hd_dim,
        transcendentals=0,
        bytes_accessed=(B * size * x_bytes
                        + hd_dim * size * w_bytes
                        + B * hd_dim * o_bytes),
    )

    return pl.pallas_call(
        _encoder_kernel,
        out_shape=jax.ShapeDtypeStruct((B, hd_dim), out_dtype),
        grid_spec=pltpu.PrefetchScalarGridSpec(
            num_scalar_prefetch=0,
            # hd_dim (j) is the OUTER/slow axis, batch (i) the INNER/fast axis:
            # each weight tile is fetched exactly once; only the small x tile
            # is re-read per hd_dim tile.
            grid=(grid_n, grid_b),
            in_specs=[
                pl.BlockSpec((tile_b, size), lambda j, i: (i, 0)),   # x tile
                pl.BlockSpec((tile_n, size), lambda j, i: (j, 0)),   # weight tile (native layout)
            ],
            out_specs=pl.BlockSpec((tile_b, tile_n), lambda j, i: (i, j)),
        ),
        compiler_params=pltpu.CompilerParams(
            dimension_semantics=("parallel", "parallel"),
            vmem_limit_bytes=vmem_limit,
        ),
        cost_estimate=cost,
    )(x, weight)


def reference_forward(x, weight):
    h = x @ weight.T
    return h, jnp.where(h > 0.0, 1.0, -1.0)


if __name__ == "__main__":
    # Small, module-consistent shapes (scale hd_dim/size up for real HDC use).
    B = 8          # batch
    SIZE = 32      # flattened input feature size ("size" arg of Encoder)
    HD_DIM = 256   # hyperdimensional vector dimension ("hd_dim" arg)

    key = jax.random.PRNGKey(0)
    kx, kw = jax.random.split(key)

    x = jax.random.normal(kx, (B, SIZE), dtype=jnp.float32)
    # Projection.reset_parameters(): weight ~ N(0, 1), shape (hd_dim, size)
    weight = jax.random.normal(kw, (HD_DIM, SIZE), dtype=jnp.float32)

    out = jax.block_until_ready(encoder_forward(x, weight))

    h_ref, ref = reference_forward(x, weight)
    assert out.shape == (B, HD_DIM)
    assert out.dtype == jnp.float32
    # MXU vs XLA accumulation order can differ right at the h ~ 0 threshold;
    # require an exact sign match only away from the threshold.
    safe = jnp.abs(h_ref) > 1e-3
    assert bool(jnp.all(jnp.where(safe, out == ref, True))), "Pallas output mismatch vs reference"

    print("KERNEL_OK")
</pallas_src>

<mosaic_0001>
module attributes {stable_mosaic.version = 11 : i64} {
  func.func @_encoder_kernel(%arg0: i32, %arg1: i32, %arg2: memref<8x32xf32, #tpu.memory_space<vmem>>, %arg3: memref<128x32xf32, #tpu.memory_space<vmem>>, %arg4: memref<8x128xf32, #tpu.memory_space<vmem>>) attributes {dimension_semantics = [#tpu.dimension_semantics<parallel>, #tpu.dimension_semantics<parallel>], iteration_bounds = array<i64: 2, 1>, scalar_prefetch = 0 : i64, scratch_operands = 0 : i64, tpu.core_type = #tpu.core_type<tc>, window_params = [{transform_indices = @transform_0, window_bounds = array<i64: 8, 32>}, {transform_indices = @transform_1, window_bounds = array<i64: 128, 32>}, {transform_indices = @transform_2, window_bounds = array<i64: 8, 128>}]} {
    %c0 = arith.constant 0 : index
    %c0_0 = arith.constant 0 : index
    %0 = vector.load %arg2[%c0, %c0_0] : memref<8x32xf32, #tpu.memory_space<vmem>>, vector<8x32xf32>
    %c0_1 = arith.constant 0 : index
    %c0_2 = arith.constant 0 : index
    %1 = vector.load %arg3[%c0_1, %c0_2] : memref<128x32xf32, #tpu.memory_space<vmem>>, vector<128x32xf32>
    %cst = arith.constant dense<0.000000e+00> : vector<8x128xf32>
    %2 = tpu.matmul %0, %1, %cst {dimension_numbers = #tpu.dot_dimension_numbers<[1], [1], [0], [0], [0, 0, 1, 0], [], []>} : vector<8x32xf32>, vector<128x32xf32>, vector<8x128xf32> -> vector<8x128xf32>
    %cst_3 = arith.constant 0.000000e+00 : f32
    %3 = vector.broadcast %cst_3 : f32 to vector<8x128xf32>
    %4 = arith.cmpf ogt, %2, %3 : vector<8x128xf32>
    %cst_4 = arith.constant 0.000000e+00 : f32
    %cst_5 = arith.constant 1.000000e+00 : f32
    %5 = arith.subf %cst_4, %cst_5 : f32
    %cst_6 = arith.constant 1.000000e+00 : f32
    %6 = vector.broadcast %cst_6 : f32 to vector<8x128xf32>
    %7 = vector.broadcast %5 : f32 to vector<8x128xf32>
    %8 = arith.select %4, %6, %7 : vector<8x128xi1>, vector<8x128xf32>
    %c0_7 = arith.constant 0 : index
    %c0_8 = arith.constant 0 : index
    %9 = vector.load %arg4[%c0_7, %c0_8] : memref<8x128xf32, #tpu.memory_space<vmem>>, vector<8x128xf32>
    tpu.vector_store %arg4[%c0_7, %c0_8], %8 {strides = array<i32>} : memref<8x128xf32, #tpu.memory_space<vmem>>, vector<8x128xf32>,
    return
  }
  func.func @transform_0(%arg0: i32, %arg1: i32) -> (i32, i32) {
    %c0_i32 = arith.constant 0 : i32
    %c0_i32_0 = arith.constant 0 : i32
    return %arg1, %c0_i32 : i32, i32
  }
  func.func @transform_1(%arg0: i32, %arg1: i32) -> (i32, i32) {
    %c0_i32 = arith.constant 0 : i32
    %c0_i32_0 = arith.constant 0 : i32
    return %arg0, %c0_i32 : i32, i32
  }
  func.func @transform_2(%arg0: i32, %arg1: i32) -> (i32, i32) {
    %c0_i32 = arith.constant 0 : i32
    return %arg1, %arg0 : i32, i32
  }
}

</mosaic_0001>

<llo_original>
// kernel: encoder_forward.1
$region0: #{encoder_forward.1}
  #allocation0 [shape = 'u32[]', space=smem, size = 0x4, offset = 0x4, fixed_abs, tag = 'smem constant byte address 0x4 - core index']
  #allocation1 [shape = 'u32[144,128]{1,0:T(1,128)}', space=vmem, size = 0x12000, scoped, tag = 'internal scratch']
  %s0 = inlined_call_operand.vmem [shape: f32[8,32], index: 0, kind: input, shape index: {}]
  %s1 = inlined_call_operand.vmem [shape: f32[256,32], index: 1, kind: input, shape index: {}]
  %s2 = inlined_call_operand.hbm [shape: f32[8,256], index: 2, kind: output, shape index: {}]
  %s3 = sld [smem:[#allocation0]]
  $region41: #{encoder_forward.1} parent=0
    _
  %s5 = ssub.s32 1, %s3
  %s6 = scalar_select 0, %s5, %s3
  $region1: #{encoder_forward.1} parent=0
    #allocation2 [shape = 'u8[8192]{0}', space=vmem, size = 0x2000, scoped, tag = 'output window, operand 0']
    #allocation3 [shape = 's32[2]{0}', space=sflag, size = 0x8, scoped, tag = 'scoped memory for encoder_forward.1']
    %7 = vsyncpa [#allocation3], 0
    %s8 = scalar_lea.sflag [#allocation3], 1
    %9 = vsyncpa %s8, 0
    loop: start=0, step=1, limit=4
    $region2: #{encoder_forward.1} parent=1 // loop_pre_header
      _
    $region3: #{encoder_forward.1} parent=1 // loop_header
      %s11 = sphi 0, %s15
      %p12 = scmp.ge.s32.totalorder %s11, 4
      %s18 = sphi 0, %s30
      %s19 = sphi 0, %s26
      %s20 = sphi 0, %s18
      %s21 = sphi 0, %s19
      %s22 = sphi 0, %s20
      %s23 = sphi 0, %s21
      %s33 = sphi 0, %s35
      %s36 = sphi 0, %s33
      %s37 = sphi 0, %s36
      %s53 = sphi 0, %s37
      %s59 = sphi 0, %s61
      %s62 = sphi 0, %s59
      %s63 = sphi 0, %s62
      %s79 = sphi 0, %s63
      %s87 = sphi 0, %s89
      %s90 = sphi 0, %s87
      %s91 = sphi 0, %s90
      %s107 = sphi 0, %s91
    $region4: #{encoder_forward.1} parent=1 // loop_header_branch
      %14 = sbr.rel (%p12) target = $region8
    $region5: #{encoder_forward.1} parent=1 // loop_body
      %s16 = ssub.s32 %s11, 1
      %s17 = ssub.s32 %s11, 2
      %s24 = sadd.s32 1, %s19
      %p25 = scmp.ge.s32.totalorder %s24, 1
      %s26 = scalar_select %p25, 0, %s24
      %s27 = sadd.s32 1, %s18
      %s28 = scalar_select %p25, %s27, %s18
      %p29 = scmp.ge.s32.totalorder %s28, 2
      %s30 = scalar_select %p29, 0, %s28
      %s31 = ssub.s32 %s19, %s26
      %p32 = scmp.eq.s32.totalorder %s31, 0
      %s34 = sadd.s32 %s33, 1
      %s35 = scalar_select %p32, %s33, %s34
      %p38 = pneg %p32
      %p39 = scmp.eq.s32.totalorder %s11, 1
      %p40 = por %p38, %p39
      %p41 = scmp.ne.s32.totalorder %s33, %s36
      %p42 = scmp.eq.s32.totalorder %s11, 0
      %p43 = por %p41, %p42
      %p44 = scmp.ne.s32.totalorder %s33, %s36
      %p45 = scmp.eq.s32.totalorder %s16, 1
      %p46 = por %p44, %p45
      %p47 = scmp.ne.s32.totalorder %s36, %s37
      %p48 = scmp.eq.s32.totalorder %s16, 0
      %p49 = por %p47, %p48
      %p50 = scmp.ne.s32.totalorder %s36, %s37
      %p51 = scmp.eq.s32.totalorder %s17, 1
      %p52 = por %p50, %p51
      %p54 = scmp.ne.s32.totalorder %s37, %s53
      %p55 = scmp.eq.s32.totalorder %s17, 0
      %p56 = por %p54, %p55
      %s57 = ssub.s32 %s18, %s30
      %p58 = scmp.eq.s32.totalorder %s57, 0
      %s60 = sadd.s32 %s59, 1
      %s61 = scalar_select %p58, %s59, %s60
      %p64 = pneg %p58
      %p65 = scmp.eq.s32.totalorder %s11, 1
      %p66 = por %p64, %p65
      %p67 = scmp.ne.s32.totalorder %s59, %s62
      %p68 = scmp.eq.s32.totalorder %s11, 0
      %p69 = por %p67, %p68
      %p70 = scmp.ne.s32.totalorder %s59, %s62
      %p71 = scmp.eq.s32.totalorder %s16, 1
      %p72 = por %p70, %p71
      %p73 = scmp.ne.s32.totalorder %s62, %s63
      %p74 = scmp.eq.s32.totalorder %s16, 0
      %p75 = por %p73, %p74
      %p76 = scmp.ne.s32.totalorder %s62, %s63
      %p77 = scmp.eq.s32.totalorder %s17, 1
      %p78 = por %p76, %p77
      %p80 = scmp.ne.s32.totalorder %s63, %s79
      %p81 = scmp.eq.s32.totalorder %s17, 0
      %p82 = por %p80, %p81
      %s83 = ssub.s32 %s19, %s26
      %s84 = ssub.s32 %s18, %s30
      %s85 = sor.u32 %s83, %s84
      %p86 = scmp.eq.s32.totalorder %s85, 0
      %s88 = sadd.s32 %s87, 1
      %s89 = scalar_select %p86, %s87, %s88
      %p92 = pneg %p86
      %p93 = scmp.eq.s32.totalorder %s11, 1
      %p94 = por %p92, %p93
      %p95 = scmp.ne.s32.totalorder %s87, %s90
      %p96 = scmp.eq.s32.totalorder %s11, 0
      %p97 = por %p95, %p96
      %p98 = scmp.ne.s32.totalorder %s87, %s90
      %p99 = scmp.eq.s32.totalorder %s16, 1
      %p100 = por %p98, %p99
      %p101 = scmp.ne.s32.totalorder %s90, %s91
      %p102 = scmp.eq.s32.totalorder %s16, 0
      %p103 = por %p101, %p102
      %p104 = scmp.ne.s32.totalorder %s90, %s91
      %p105 = scmp.eq.s32.totalorder %s17, 1
      %p106 = por %p104, %p105
      %p108 = scmp.ne.s32.totalorder %s91, %s107
      %p109 = scmp.eq.s32.totalorder %s17, 0
      %p110 = por %p108, %p109
      %p111 = scmp.le.s32.totalorder 1, %s11
      %p112 = scmp.lt.s32.totalorder %s11, 3
      %p113 = pnand %p111, %p112
      %p114 = pneg %p113
      // Predicated region
      $region9: #{encoder_forward.1} parent=5 // pred_check
        _
      $region10: #{encoder_forward.1} parent=5 // pred_check_branch
        %116 = sbr.rel (%p113) target = $region12
      $region11: #{encoder_forward.1} parent=5 // pred_region
        %s117 = ssub.s32 %s11, 1
        // Predicated region
        $region13: #{encoder_forward.1} parent=11 // pred_check
          %p118 = pneg %p49
        $region14: #{encoder_forward.1} parent=11 // pred_check_branch
          %120 = sbr.rel (%p118) target = $region16
        $region15: #{encoder_forward.1} parent=11 // pred_region
          %p121 = scmp.lt.s32.totalorder %s21, 0
          %s122 = scalar_select %p121, %s21, 0
          %s123 = smul.addr %s122, 8
          %s124 = scalar_lea.vmem %s0, %s123
        $region16: #{encoder_forward.1} parent=11 // pred_fallthru
          _
      $region12: #{encoder_forward.1} parent=5 // pred_fallthru
        _
      %p125 = scmp.lt.s32.totalorder %s11, 2
      // Predicated region
      $region17: #{encoder_forward.1} parent=5 // pred_check
        %p126 = pneg %p125
      $region18: #{encoder_forward.1} parent=5 // pred_check_branch
        %128 = sbr.rel (%p126) target = $region20
      $region19: #{encoder_forward.1} parent=5 // pred_region
        // Predicated region
        $region21: #{encoder_forward.1} parent=19 // pred_check
          %p129 = pneg %p69
        $region22: #{encoder_forward.1} parent=19 // pred_check_branch
          %131 = sbr.rel (%p129) target = $region24
        $region23: #{encoder_forward.1} parent=19 // pred_region
          %s132 = smul.u32 16, %s18
          %p133 = scmp.lt.s32.totalorder %s132, 31
          %s134 = scalar_select %p133, %s132, 31
          %s135 = smul.addr %s134, 8
          %s136 = scalar_lea.vmem %s1, %s135
          %s137 = smul.u32 16, %s18
        $region24: #{encoder_forward.1} parent=19 // pred_fallthru
          _
      $region20: #{encoder_forward.1} parent=5 // pred_fallthru
        _
      %p138 = scmp.le.s32.totalorder 1, %s11
      %p139 = scmp.lt.s32.totalorder %s11, 3
      %p140 = pnand %p138, %p139
      %p141 = pneg %p140
      // Predicated region
      $region25: #{encoder_forward.1} parent=5 // pred_check
        _
      $region26: #{encoder_forward.1} parent=5 // pred_check_branch
        %143 = sbr.rel (%p140) target = $region28
      $region27: #{encoder_forward.1} parent=5 // pred_region
        %s144 = ssub.s32 %s11, 1
        %p145 = scmp.lt.s32.totalorder %s21, 0
        %s146 = scalar_select %p145, %s21, 0
        %s147 = smul.addr %s146, 8
        %s148 = scalar_lea.vmem %s0, %s147
        %p149 = pneg %p49
        %p150 = pneg %p46
        %s151 = smul.u32 16, %s20
        %p152 = scmp.lt.s32.totalorder %s151, 31
        %s153 = scalar_select %p152, %s151, 31
        %s154 = smul.addr %s153, 8
        %s155 = scalar_lea.vmem %s1, %s154
        %p156 = pneg %p75
        %p157 = pneg %p72
        %p158 = pneg %p103
        %p159 = pneg %p100
        %s160 = sand.u32 %s90, 1
        %s161 = scalar_lea.sflag [#allocation3], %s160
        %s162 = sand.u32 %s90, 1
        %s163 = smul.addr %s162, 8
        %s164 = scalar_lea.vmem [#allocation2], %s163
        %p165 = scmp.lt.s32.totalorder %s21, 0
        %s166 = scalar_select %p165, %s21, 0
        %s167 = smul.addr %s166, 8
        %s168 = scalar_lea.vmem %s0, %s167
        %s169 = smul.u32 16, %s20
        %p170 = scmp.lt.s32.totalorder %s169, 31
        %s171 = scalar_select %p170, %s169, 31
        %s172 = smul.addr %s171, 8
        %s173 = scalar_lea.vmem %s1, %s172
        %s174 = smul.u32 16, %s20
        %v175 = vld [vmem:[%s168] sm:$0xff]
        %v176 = vld [vmem:[%s173] sm:$0xff]
        %v177 = vld [vmem:[%s173 + $0x8] sm:$0xff]
        %v178 = vld [vmem:[%s173 + $0x10] sm:$0xff]
        %v179 = vld [vmem:[%s173 + $0x18] sm:$0xff]
        %v180 = vld [vmem:[%s173 + $0x20] sm:$0xff]
        %v181 = vld [vmem:[%s173 + $0x28] sm:$0xff]
        %v182 = vld [vmem:[%s173 + $0x30] sm:$0xff]
        %v183 = vld [vmem:[%s173 + $0x38] sm:$0xff]
        %v184 = vld [vmem:[%s173 + $0x40] sm:$0xff]
        %v185 = vld [vmem:[%s173 + $0x48] sm:$0xff]
        %v186 = vld [vmem:[%s173 + $0x50] sm:$0xff]
        %v187 = vld [vmem:[%s173 + $0x58] sm:$0xff]
        %v188 = vld [vmem:[%s173 + $0x60] sm:$0xff]
        %v189 = vld [vmem:[%s173 + $0x68] sm:$0xff]
        %v190 = vld [vmem:[%s173 + $0x70] sm:$0xff]
        %v191 = vld [vmem:[%s173 + $0x78] sm:$0xff]
        %vm192 = vcmask 261120
        %v194 = vsel %vm192, %v175, 0
        %v197 = vsel %vm192, %v176, 0
        %v200 = vsel %vm192, %v177, 0
        %v203 = vsel %vm192, %v178, 0
        %v206 = vsel %vm192, %v179, 0
        %v209 = vsel %vm192, %v180, 0
        %v212 = vsel %vm192, %v181, 0
        %v215 = vsel %vm192, %v182, 0
        %v218 = vsel %vm192, %v183, 0
        %v221 = vsel %vm192, %v184, 0
        %v224 = vsel %vm192, %v185, 0
        %v227 = vsel %vm192, %v186, 0
        %v230 = vsel %vm192, %v187, 0
        %v233 = vsel %vm192, %v188, 0
        %v236 = vsel %vm192, %v189, 0
        %v239 = vsel %vm192, %v190, 0
        %v242 = vsel %vm192, %v191, 0
        %244 = vmatprep.subr.mxu0 0.0
        %245 = vmatpush1.xpose.msra.mxu0 %v197
        %246 = vmatprep.subr.mxu0 0.0
        %247 = vmatpush1.xpose.msra.mxu0 %v200
        %248 = vmatprep.subr.mxu0 0.0
        %249 = vmatpush1.xpose.msra.mxu0 %v203
        %250 = vmatprep.subr.mxu0 0.0
        %251 = vmatpush1.xpose.msra.mxu0 %v206
        %252 = vmatprep.subr.mxu0 0.0
        %253 = vmatpush1.xpose.msra.mxu0 %v209
        %254 = vmatprep.subr.mxu0 0.0
        %255 = vmatpush1.xpose.msra.mxu0 %v212
        %256 = vmatprep.subr.mxu0 0.0
        %257 = vmatpush1.xpose.msra.mxu0 %v215
        %258 = vmatprep.subr.mxu0 0.0
        %259 = vmatpush1.xpose.msra.mxu0 %v218
        %260 = vmatprep.subr.mxu0 0.0
        %261 = vmatpush1.xpose.msra.mxu0 %v221
        %262 = vmatprep.subr.mxu0 0.0
        %263 = vmatpush1.xpose.msra.mxu0 %v224
        %264 = vmatprep.subr.mxu0 0.0
        %265 = vmatpush1.xpose.msra.mxu0 %v227
        %266 = vmatprep.subr.mxu0 0.0
        %267 = vmatpush1.xpose.msra.mxu0 %v230
        %268 = vmatprep.subr.mxu0 0.0
        %269 = vmatpush1.xpose.msra.mxu0 %v233
        %270 = vmatprep.subr.mxu0 0.0
        %271 = vmatpush1.xpose.msra.mxu0 %v236
        %272 = vmatprep.subr.mxu0 0.0
        %273 = vmatpush1.xpose.msra.mxu0 %v239
        %274 = vmatprep.subr.mxu0 0.0
        %275 = vmatpush1.xpose.msra.mxu0 %v242
        %276 = vmatprep.subr.mxu0 0.0
        %277 = vmatpush1.xpose.msra.mxu0 0.0
        %278 = vmatprep.subr.mxu0 0.0
        %279 = vmatpush1.xpose.msra.mxu0 0.0
        %280 = vmatprep.subr.mxu0 0.0
        %281 = vmatpush1.xpose.msra.mxu0 0.0
        %282 = vmatprep.subr.mxu0 0.0
        %283 = vmatpush1.xpose.msra.mxu0 0.0
        %284 = vmatprep.subr.mxu0 0.0
        %285 = vmatpush1.xpose.msra.mxu0 0.0
        %286 = vmatprep.subr.mxu0 0.0
        %287 = vmatpush1.xpose.msra.mxu0 0.0
        %288 = vmatprep.subr.mxu0 0.0
        %289 = vmatpush1.xpose.msra.mxu0 0.0
        %290 = vmatprep.subr.mxu0 0.0
        %291 = vmatpush1.xpose.msra.mxu0 0.0
        %292 = vmatprep.subr.mxu0 0.0
        %293 = vmatpush1.xpose.msra.mxu0 0.0
        %294 = vmatprep.subr.mxu0 0.0
        %295 = vmatpush1.xpose.msra.mxu0 0.0
        %296 = vmatprep.subr.mxu0 0.0
        %297 = vmatpush1.xpose.msra.mxu0 0.0
        %298 = vmatprep.subr.mxu0 0.0
        %299 = vmatpush1.xpose.msra.mxu0 0.0
        %300 = vmatprep.subr.mxu0 0.0
        %301 = vmatpush1.xpose.msra.mxu0 0.0
        %302 = vmatprep.subr.mxu0 0.0
        %303 = vmatpush1.xpose.msra.mxu0 0.0
        %304 = vmatprep.subr.mxu0 0.0
        %305 = vmatpush1.xpose.msra.mxu0 0.0
        %306 = vmatprep.subr.mxu0 0.0
        %307 = vmatpush1.xpose.msra.mxu0 0.0
        %308 = vmatprep.mubr.f32.mxu0 0.0
        %309 = vmatmul.mubr.f32.gmra.mrb[0].mxu0 %v194
        %v310 = vpop.f32.mrb[0].mxu0
        %v311 = vadd.f32 0.0, %v310
        %v312 = vpop.f32.mrb[0].mxu0
        %313 = vdwg.mxu0
        %vm314 = vcmp.gt.f32.partialorder %v311, 0.0
        %v315 = vsel %vm314, 1.0, -1.0
        %316 = vst [vmem:[%s164] sm:$0xff] %v315
        %s317 = sand.u32 %s90, 1
        %s318 = scalar_lea.sflag [#allocation3], %s317
        %s319 = sand.u32 %s90, 1
        %s320 = smul.addr %s319, 8
        %s321 = scalar_lea.vmem [#allocation2], %s320
        // Predicated region
        $region29: #{encoder_forward.1} parent=27 // pred_check
          %p322 = pneg %p100
        $region30: #{encoder_forward.1} parent=27 // pred_check_branch
          %324 = sbr.rel (%p322) target = $region32
        $region31: #{encoder_forward.1} parent=27 // pred_region
          %s326 = ssub.s32 128, 128
          %327 = vsyncadd %s318, %s326
          %s328 = smul.addr %s21, 2
          %s329 = sadd.s32 %s20, %s328
          %s330 = smul.addr %s329, 128
          %s331 = scalar_lea.hbm %s2, %s330
          %s333 = sshll.u32 %s321, 4
          %s334 = int_to_ptr.vmem [resolvable:$true] %s333
          %336 = dma.vmem_to_hbm [thread:$0]  %s334, 128, %s331, %s318
        $region32: #{encoder_forward.1} parent=27 // pred_fallthru
          _
      $region28: #{encoder_forward.1} parent=5 // pred_fallthru
        _
      %p337 = scmp.le.s32.totalorder 2, %s11
      // Predicated region
      $region33: #{encoder_forward.1} parent=5 // pred_check
        %p338 = pneg %p337
      $region34: #{encoder_forward.1} parent=5 // pred_check_branch
        %340 = sbr.rel (%p338) target = $region36
      $region35: #{encoder_forward.1} parent=5 // pred_region
        %s341 = ssub.s32 %s11, 2
        // Predicated region
        $region37: #{encoder_forward.1} parent=35 // pred_check
          %p342 = pneg %p106
        $region38: #{encoder_forward.1} parent=35 // pred_check_branch
          %344 = sbr.rel (%p342) target = $region40
        $region39: #{encoder_forward.1} parent=35 // pred_region
          %s345 = sand.u32 %s91, 1
          %s346 = scalar_lea.sflag [#allocation3], %s345
          %s347 = sand.u32 %s91, 1
          %s348 = smul.addr %s347, 8
          %s349 = scalar_lea.vmem [#allocation2], %s348
          %350 = dma.done %s346, 128
        $region40: #{encoder_forward.1} parent=35 // pred_fallthru
          _
      $region36: #{encoder_forward.1} parent=5 // pred_fallthru
        _
    $region6: #{encoder_forward.1} parent=1 // loop_footer
      %s15 = sadd.s32 1, %s11
    $region7: #{encoder_forward.1} parent=1 // loop_footer_branch
      %10 = sbr.rel target = $region3
    $region8: #{encoder_forward.1} parent=1 // loop_exit
      _
    %351 = vsyncpa [#allocation3], 1
    %s352 = scalar_lea.sflag [#allocation3], 1
    %353 = vsyncpa %s352, 1

</llo_original>
